<compile_context>
chip_gen: v6e
topology: v6e:2x2x1
jax: 0.10.0
libtpu: 0.0.40
codegen_flags: <defaults>
</compile_context>

<pallas_src>
import functools

import jax
import jax.numpy as jnp
from jax import lax
from jax.experimental import pallas as pl
from jax.experimental.pallas import tpu as pltpu

TEMP = 0.05
COS_EPS = 1e-8      # torch CosineSimilarity eps (see note above)
NEG_INF = -1e30


def _round_up(x, m):
    return ((x + m - 1) // m) * m


def _infonce_kernel(q_ref, k_ref, qu_ref, loss_ref,
                    qhat_ref, diag_ref, m_ref, l_ref, *, q_valid, ragged):
    b = pl.program_id(0)            # batch block ("parallel")
    s = pl.program_id(1)            # queue tile  ("arbitrary" reduction axis)
    n_s = pl.num_programs(1)
    inv_t = jnp.float32(1.0 / TEMP)
    tb = q_ref.shape[0]
    tq = qu_ref.shape[0]

    # ---------------- one-time (per batch block) init -----------------------
    @pl.when(s == 0)
    def _init():
        q = q_ref[...].astype(jnp.float32)                       # [tb, D]
        k = k_ref[...].astype(jnp.float32)                       # [B,  D]
        q_inv = lax.rsqrt(jnp.maximum(jnp.sum(q * q, axis=-1, keepdims=True),
                                      jnp.float32(COS_EPS)))
        k_inv = lax.rsqrt(jnp.maximum(jnp.sum(k * k, axis=-1, keepdims=True),
                                      jnp.float32(COS_EPS)))
        q_hat = q * (q_inv * inv_t)          # 1/temp folded into q_hat
        k_hat = k * k_inv
        qhat_ref[...] = q_hat

        # positive logit of local row r is cos(q_r, k_{b*tb + r}) / temp
        row0 = pl.multiple_of(b * tb, tb)
        k_own = k_ref[pl.ds(row0, tb), :].astype(jnp.float32)    # [tb, D]
        k_own_inv = lax.rsqrt(jnp.maximum(
            jnp.sum(k_own * k_own, axis=-1, keepdims=True), jnp.float32(COS_EPS)))
        diag_ref[...] = jnp.sum(q_hat * (k_own * k_own_inv),
                                axis=-1, keepdims=True)          # [tb, 1]

        # keys block contributes to the softmax denominator exactly once
        pos = lax.dot_general(q_hat, k_hat, (((1,), (1,)), ((), ())),
                              preferred_element_type=jnp.float32)  # [tb, B]
        m0 = jnp.max(pos, axis=-1, keepdims=True)
        m_ref[...] = m0
        l_ref[...] = jnp.sum(jnp.exp(pos - m0), axis=-1, keepdims=True)

    # ---------------- per queue tile: logits + online LSE -------------------
    qu = qu_ref[...]                         # [tq, D], stored dtype (bf16/f32)

    # lane-resident squared column norms via a 1-row matmul -> [1, tq]
    ones_row = jnp.ones((1, qu.shape[-1]), dtype=qu.dtype)
    sumsq = lax.dot_general(ones_row, qu * qu, (((1,), (1,)), ((), ())),
                            preferred_element_type=jnp.float32)
    inv_norm = lax.rsqrt(jnp.maximum(sumsq, jnp.float32(COS_EPS)))  # [1, tq]

    # raw scaled dots; queue-side norm applied as a post-matmul column scale
    neg = lax.dot_general(qhat_ref[...].astype(qu.dtype), qu,
                          (((1,), (1,)), ((), ())),
                          preferred_element_type=jnp.float32)       # [tb, tq]
    neg = neg * inv_norm

    if ragged:  # static: only traced when Q % tq != 0 (partial last tile)
        col = lax.broadcasted_iota(jnp.int32, neg.shape, 1)
        neg = jnp.where(col < q_valid - s * tq, neg, jnp.float32(NEG_INF))

    m_prev = m_ref[...]
    m_new = jnp.maximum(m_prev, jnp.max(neg, axis=-1, keepdims=True))
    alpha = jnp.exp(m_prev - m_new)
    l_ref[...] = l_ref[...] * alpha + jnp.sum(jnp.exp(neg - m_new),
                                              axis=-1, keepdims=True)
    m_ref[...] = m_new

    # ---------------- finalize: partial loss for this batch block -----------
    @pl.when(s == n_s - 1)
    def _finalize():
        lse = m_ref[...] + jnp.log(l_ref[...])                    # [tb, 1]
        part = jnp.sum(lse - diag_ref[...])                       # scalar
        loss_ref[...] = jnp.full(loss_ref.shape, part, dtype=jnp.float32)


def infonce_with_queue(query, keys, queue, *, tq=2048, batch_blocks=1):
    """query/keys: [B, D], queue: [Q, D] (f32 or bf16) -> scalar f32 loss.

    batch_blocks > 1 adds a leading "parallel" grid axis (use 2 on v7x's dual
    TensorCores; keep 1 on single-core v5e/v6e, where it would only re-stream
    the queue).
    """
    B, D = query.shape
    Q, Dq = queue.shape
    assert keys.shape == (B, D) and Dq == D
    assert B % batch_blocks == 0, "B must divide evenly into batch_blocks"
    tb = B // batch_blocks
    if batch_blocks > 1:
        assert tb % 8 == 0, "per-block batch rows must be a multiple of 8"

    # queue tile: >= 8 sublanes, multiple of 8, no bigger than needed
    tq = int(max(8, min(tq, _round_up(Q, 8))))
    tq = _round_up(tq, 8)
    n_tiles = pl.cdiv(Q, tq)
    ragged = (Q % tq) != 0

    kernel = functools.partial(_infonce_kernel, q_valid=Q, ragged=ragged)

    qu_bytes = jnp.dtype(queue.dtype).itemsize
    in_bytes = jnp.dtype(query.dtype).itemsize
    # double-buffered queue tiles + resident q/k input blocks + f32 scratch
    vmem_need = (2 * tq * D * qu_bytes
                 + 2 * tb * D * in_bytes + 2 * B * D * in_bytes
                 + tb * D * 4 + 3 * tb * 4 + 2 * 8 * 128 * 4)
    vmem_limit = int(min(max(2 * vmem_need, 4 << 20), 100 << 20))

    cost = pl.CostEstimate(
        flops=int(2 * B * D * (B + Q) + 2 * Q * D),
        transcendentals=int(B * (B + Q) + 2 * B + Q),
        bytes_accessed=int(Q * D * qu_bytes + 2 * B * D * in_bytes
                           + batch_blocks * 8 * 128 * 4),
    )

    out = pl.pallas_call(
        kernel,
        out_shape=jax.ShapeDtypeStruct((batch_blocks, 8, 128), jnp.float32),
        grid_spec=pltpu.PrefetchScalarGridSpec(
            num_scalar_prefetch=0,
            grid=(batch_blocks, n_tiles),
            in_specs=[
                pl.BlockSpec((tb, D), lambda b, s: (b, 0)),   # query block
                pl.BlockSpec((B, D), lambda b, s: (0, 0)),    # keys (all rows)
                pl.BlockSpec((tq, D), lambda b, s: (s, 0)),   # queue (streamed)
            ],
            out_specs=pl.BlockSpec((1, 8, 128), lambda b, s: (b, 0, 0)),
            scratch_shapes=[
                pltpu.VMEM((tb, D), jnp.float32),   # q_hat (pre-scaled by 1/temp)
                pltpu.VMEM((tb, 1), jnp.float32),   # diag  (positive logits)
                pltpu.VMEM((tb, 1), jnp.float32),   # running max
                pltpu.VMEM((tb, 1), jnp.float32),   # running sum(exp)
            ],
        ),
        compiler_params=pltpu.CompilerParams(
            dimension_semantics=("parallel", "arbitrary"),
            vmem_limit_bytes=vmem_limit,
        ),
        cost_estimate=cost,
    )(query, keys, queue)

    # each batch block wrote sum_i (lse_i - pos_i) into element [b, 0, 0]
    return jnp.sum(out[:, 0, 0]) / jnp.float32(B)


def _reference(query, keys, queue):
    """Pure-JAX reference mirroring the PyTorch module."""
    def cos(a, b):  # a: [B,1,D], b: [1,N,D]
        dots = jnp.sum(a * b, axis=-1)
        denom = jnp.maximum(
            jnp.linalg.norm(a, axis=-1) * jnp.linalg.norm(b, axis=-1), COS_EPS)
        return dots / denom

    q = query[:, None, :]
    sim_pos = cos(q, keys[None, :, :])
    sim_neg = cos(q, queue[None, :, :])
    logits = jnp.concatenate([sim_pos, sim_neg], axis=1) / TEMP
    lse = jax.scipy.special.logsumexp(logits, axis=-1)
    n = query.shape[0]
    return jnp.mean(lse - logits[jnp.arange(n), jnp.arange(n)])


if __name__ == "__main__":
    # --- run 1: f32, multi-tile queue with a ragged tail (Q % tq != 0) ------
    B, D, Q = 8, 32, 20
    kq, kk, kqu = jax.random.split(jax.random.PRNGKey(0), 3)
    query = jax.random.normal(kq, (B, D), dtype=jnp.float32)
    keys = jax.random.normal(kk, (B, D), dtype=jnp.float32)
    queue = jax.random.normal(kqu, (Q, D), dtype=jnp.float32)

    loss = jax.block_until_ready(infonce_with_queue(query, keys, queue, tq=8))
    ref = jax.block_until_ready(_reference(query, keys, queue))
    assert jnp.allclose(loss, ref, atol=1e-4, rtol=1e-4), (loss, ref)

    # --- run 2: bf16 queue (half DMA + bf16 MXU), 2 "parallel" batch blocks -
    B2, D2, Q2 = 16, 128, 48
    kq2, kk2, kqu2 = jax.random.split(jax.random.PRNGKey(1), 3)
    query2 = jax.random.normal(kq2, (B2, D2), dtype=jnp.float32)
    keys2 = jax.random.normal(kk2, (B2, D2), dtype=jnp.float32)
    queue2 = jax.random.normal(kqu2, (Q2, D2),
                               dtype=jnp.float32).astype(jnp.bfloat16)

    loss2 = jax.block_until_ready(
        infonce_with_queue(query2, keys2, queue2, tq=16, batch_blocks=2))
    ref2 = jax.block_until_ready(
        _reference(query2, keys2, queue2.astype(jnp.float32)))
    # bf16 queue -> negative logits are computed on the bf16 MXU; compare
    # against the f32 reference with a bf16-appropriate tolerance.
    assert jnp.allclose(loss2, ref2, atol=5e-2, rtol=5e-2), (loss2, ref2)

    print("KERNEL_OK")
</pallas_src>

<mosaic_0001>
module attributes {stable_mosaic.version = 11 : i64} {
  func.func @_infonce_kernel(%arg0: i32, %arg1: i32, %arg2: memref<8x32xf32, #tpu.memory_space<vmem>>, %arg3: memref<8x32xf32, #tpu.memory_space<vmem>>, %arg4: memref<8x32xf32, #tpu.memory_space<vmem>>, %arg5: memref<1x8x128xf32, #tpu.memory_space<vmem>>, %arg6: memref<8x32xf32, #tpu.memory_space<vmem>>, %arg7: memref<8x1xf32, #tpu.memory_space<vmem>>, %arg8: memref<8x1xf32, #tpu.memory_space<vmem>>, %arg9: memref<8x1xf32, #tpu.memory_space<vmem>>) attributes {dimension_semantics = [#tpu.dimension_semantics<parallel>, #tpu.dimension_semantics<arbitrary>], iteration_bounds = array<i64: 1, 3>, scalar_prefetch = 0 : i64, scratch_operands = 4 : i64, tpu.core_type = #tpu.core_type<tc>, window_params = [{transform_indices = @transform_0, window_bounds = array<i64: 8, 32>}, {pipeline_mode = #tpu.pipeline_mode<synchronous>, transform_indices = @transform_1, window_bounds = array<i64: 8, 32>}, {transform_indices = @transform_2, window_bounds = array<i64: 8, 32>}, {transform_indices = @transform_3, window_bounds = array<i64: 1, 8, 128>}]} {
    %c0_i32 = arith.constant 0 : i32
    %0 = arith.cmpi eq, %arg1, %c0_i32 : i32
    %1 = arith.extui %0 : i1 to i32
    %cst = arith.constant 2.000000e+01 : f32
    %c0_i32_0 = arith.constant 0 : i32
    %2 = arith.cmpi ne, %1, %c0_i32_0 : i32
    scf.if %2 {
      %c0_20 = arith.constant 0 : index
      %c0_21 = arith.constant 0 : index
      %40 = vector.load %arg2[%c0_20, %c0_21] : memref<8x32xf32, #tpu.memory_space<vmem>>, vector<8x32xf32>
      %c0_22 = arith.constant 0 : index
      %c0_23 = arith.constant 0 : index
      %41 = vector.load %arg3[%c0_22, %c0_23] : memref<8x32xf32, #tpu.memory_space<vmem>>, vector<8x32xf32>
      %42 = arith.mulf %40, %40 : vector<8x32xf32>
      %cst_24 = arith.constant dense<0.000000e+00> : vector<8xf32>
      %43 = vector.multi_reduction <add>, %42, %cst_24 [1] : vector<8x32xf32> to vector<8xf32>
      %44 = vector.shape_cast %43 : vector<8xf32> to vector<8x1xf32>
      %cst_25 = arith.constant 9.99999993E-9 : f32
      %45 = vector.broadcast %cst_25 : f32 to vector<8x1xf32>
      %46 = arith.maximumf %44, %45 : vector<8x1xf32>
      %47 = math.rsqrt %46 : vector<8x1xf32>
      %48 = arith.mulf %41, %41 : vector<8x32xf32>
      %cst_26 = arith.constant dense<0.000000e+00> : vector<8xf32>
      %49 = vector.multi_reduction <add>, %48, %cst_26 [1] : vector<8x32xf32> to vector<8xf32>
      %50 = vector.shape_cast %49 : vector<8xf32> to vector<8x1xf32>
      %cst_27 = arith.constant 9.99999993E-9 : f32
      %51 = vector.broadcast %cst_27 : f32 to vector<8x1xf32>
      %52 = arith.maximumf %50, %51 : vector<8x1xf32>
      %53 = math.rsqrt %52 : vector<8x1xf32>
      %54 = vector.broadcast %cst : f32 to vector<8x1xf32>
      %55 = arith.mulf %47, %54 : vector<8x1xf32>
      %56 = vector.broadcast %55 : vector<8x1xf32> to vector<8x32xf32>
      %57 = arith.mulf %40, %56 : vector<8x32xf32>
      %58 = vector.broadcast %53 : vector<8x1xf32> to vector<8x32xf32>
      %59 = arith.mulf %41, %58 : vector<8x32xf32>
      %c0_28 = arith.constant 0 : index
      %c0_29 = arith.constant 0 : index
      %60 = vector.load %arg6[%c0_28, %c0_29] : memref<8x32xf32, #tpu.memory_space<vmem>>, vector<8x32xf32>
      tpu.vector_store %arg6[%c0_28, %c0_29], %57 {strides = array<i32>} : memref<8x32xf32, #tpu.memory_space<vmem>>, vector<8x32xf32>,
      %c8_i32_30 = arith.constant 8 : i32
      %61 = arith.muli %arg0, %c8_i32_30 : i32
      %62 = tpu.assume_multiple %61, 8 : i32
      %63 = arith.index_cast %62 : i32 to index
      %c0_31 = arith.constant 0 : index
      %64 = vector.load %arg3[%63, %c0_31] : memref<8x32xf32, #tpu.memory_space<vmem>>, vector<8x32xf32>
      %65 = arith.mulf %64, %64 : vector<8x32xf32>
      %cst_32 = arith.constant dense<0.000000e+00> : vector<8xf32>
      %66 = vector.multi_reduction <add>, %65, %cst_32 [1] : vector<8x32xf32> to vector<8xf32>
      %67 = vector.shape_cast %66 : vector<8xf32> to vector<8x1xf32>
      %cst_33 = arith.constant 9.99999993E-9 : f32
      %68 = vector.broadcast %cst_33 : f32 to vector<8x1xf32>
      %69 = arith.maximumf %67, %68 : vector<8x1xf32>
      %70 = math.rsqrt %69 : vector<8x1xf32>
      %71 = vector.broadcast %70 : vector<8x1xf32> to vector<8x32xf32>
      %72 = arith.mulf %64, %71 : vector<8x32xf32>
      %73 = arith.mulf %57, %72 : vector<8x32xf32>
      %cst_34 = arith.constant dense<0.000000e+00> : vector<8xf32>
      %74 = vector.multi_reduction <add>, %73, %cst_34 [1] : vector<8x32xf32> to vector<8xf32>
      %75 = vector.shape_cast %74 : vector<8xf32> to vector<8x1xf32>
      %c0_35 = arith.constant 0 : index
      %c0_36 = arith.constant 0 : index
      %76 = vector.load %arg7[%c0_35, %c0_36] : memref<8x1xf32, #tpu.memory_space<vmem>>, vector<8x1xf32>
      tpu.vector_store %arg7[%c0_35, %c0_36], %75 {strides = array<i32>} : memref<8x1xf32, #tpu.memory_space<vmem>>, vector<8x1xf32>,
      %cst_37 = arith.constant dense<0.000000e+00> : vector<8x8xf32>
      %77 = tpu.matmul %57, %59, %cst_37 {dimension_numbers = #tpu.dot_dimension_numbers<[1], [1], [0], [0], [0, 0, 1, 0], [], []>} : vector<8x32xf32>, vector<8x32xf32>, vector<8x8xf32> -> vector<8x8xf32>
      %cst_38 = arith.constant dense<0xFF800000> : vector<8xf32>
      %78 = vector.multi_reduction <maximumf>, %77, %cst_38 [1] : vector<8x8xf32> to vector<8xf32>
      %79 = vector.shape_cast %78 : vector<8xf32> to vector<8x1xf32>
      %c0_39 = arith.constant 0 : index
      %c0_40 = arith.constant 0 : index
      %80 = vector.load %arg8[%c0_39, %c0_40] : memref<8x1xf32, #tpu.memory_space<vmem>>, vector<8x1xf32>
      tpu.vector_store %arg8[%c0_39, %c0_40], %79 {strides = array<i32>} : memref<8x1xf32, #tpu.memory_space<vmem>>, vector<8x1xf32>,
      %81 = vector.broadcast %79 : vector<8x1xf32> to vector<8x8xf32>
      %82 = arith.subf %77, %81 : vector<8x8xf32>
      %83 = math.exp %82 : vector<8x8xf32>
      %cst_41 = arith.constant dense<0.000000e+00> : vector<8xf32>
      %84 = vector.multi_reduction <add>, %83, %cst_41 [1] : vector<8x8xf32> to vector<8xf32>
      %85 = vector.shape_cast %84 : vector<8xf32> to vector<8x1xf32>
      %c0_42 = arith.constant 0 : index
      %c0_43 = arith.constant 0 : index
      %86 = vector.load %arg9[%c0_42, %c0_43] : memref<8x1xf32, #tpu.memory_space<vmem>>, vector<8x1xf32>
      tpu.vector_store %arg9[%c0_42, %c0_43], %85 {strides = array<i32>} : memref<8x1xf32, #tpu.memory_space<vmem>>, vector<8x1xf32>,
    } else {
    }
    %c0 = arith.constant 0 : index
    %c0_1 = arith.constant 0 : index
    %3 = vector.load %arg4[%c0, %c0_1] : memref<8x32xf32, #tpu.memory_space<vmem>>, vector<8x32xf32>
    %cst_2 = arith.constant 1.000000e+00 : f32
    %4 = vector.broadcast %cst_2 : f32 to vector<1x32xf32>
    %5 = arith.mulf %3, %3 : vector<8x32xf32>
    %cst_3 = arith.constant dense<0.000000e+00> : vector<1x8xf32>
    %6 = tpu.matmul %4, %5, %cst_3 {dimension_numbers = #tpu.dot_dimension_numbers<[1], [1], [0], [0], [0, 0, 1, 0], [], []>} : vector<1x32xf32>, vector<8x32xf32>, vector<1x8xf32> -> vector<1x8xf32>
    %cst_4 = arith.constant 9.99999993E-9 : f32
    %7 = vector.broadcast %cst_4 : f32 to vector<1x8xf32>
    %8 = arith.maximumf %6, %7 : vector<1x8xf32>
    %9 = math.rsqrt %8 : vector<1x8xf32>
    %c0_5 = arith.constant 0 : index
    %c0_6 = arith.constant 0 : index
    %10 = vector.load %arg6[%c0_5, %c0_6] : memref<8x32xf32, #tpu.memory_space<vmem>>, vector<8x32xf32>
    %cst_7 = arith.constant dense<0.000000e+00> : vector<8x8xf32>
    %11 = tpu.matmul %10, %3, %cst_7 {dimension_numbers = #tpu.dot_dimension_numbers<[1], [1], [0], [0], [0, 0, 1, 0], [], []>} : vector<8x32xf32>, vector<8x32xf32>, vector<8x8xf32> -> vector<8x8xf32>
    %12 = vector.broadcast %9 : vector<1x8xf32> to vector<8x8xf32>
    %13 = arith.mulf %11, %12 : vector<8x8xf32>
    %14 = tpu.iota {dimensions = array<i32: 1>} : vector<8x8xi32>
    %c8_i32 = arith.constant 8 : i32
    %15 = arith.muli %arg1, %c8_i32 : i32
    %c20_i32 = arith.constant 20 : i32
    %16 = arith.subi %c20_i32, %15 : i32
    %17 = vector.broadcast %16 : i32 to vector<8x8xi32>
    %18 = arith.cmpi slt, %14, %17 : vector<8x8xi32>
    %cst_8 = arith.constant -1.000000e+30 : f32
    %19 = vector.broadcast %cst_8 : f32 to vector<8x8xf32>
    %20 = arith.select %18, %13, %19 : vector<8x8xi1>, vector<8x8xf32>
    %c0_9 = arith.constant 0 : index
    %c0_10 = arith.constant 0 : index
    %21 = vector.load %arg8[%c0_9, %c0_10] : memref<8x1xf32, #tpu.memory_space<vmem>>, vector<8x1xf32>
    %cst_11 = arith.constant dense<0xFF800000> : vector<8xf32>
    %22 = vector.multi_reduction <maximumf>, %20, %cst_11 [1] : vector<8x8xf32> to vector<8xf32>
    %23 = vector.shape_cast %22 : vector<8xf32> to vector<8x1xf32>
    %24 = arith.maximumf %21, %23 : vector<8x1xf32>
    %25 = arith.subf %21, %24 : vector<8x1xf32>
    %26 = math.exp %25 : vector<8x1xf32>
    %c0_12 = arith.constant 0 : index
    %c0_13 = arith.constant 0 : index
    %27 = vector.load %arg9[%c0_12, %c0_13] : memref<8x1xf32, #tpu.memory_space<vmem>>, vector<8x1xf32>
    %28 = arith.mulf %27, %26 : vector<8x1xf32>
    %29 = vector.broadcast %24 : vector<8x1xf32> to vector<8x8xf32>
    %30 = arith.subf %20, %29 : vector<8x8xf32>
    %31 = math.exp %30 : vector<8x8xf32>
    %cst_14 = arith.constant dense<0.000000e+00> : vector<8xf32>
    %32 = vector.multi_reduction <add>, %31, %cst_14 [1] : vector<8x8xf32> to vector<8xf32>
    %33 = vector.shape_cast %32 : vector<8xf32> to vector<8x1xf32>
    %34 = arith.addf %28, %33 : vector<8x1xf32>
    %c0_15 = arith.constant 0 : index
    %c0_16 = arith.constant 0 : index
    %35 = vector.load %arg9[%c0_15, %c0_16] : memref<8x1xf32, #tpu.memory_space<vmem>>, vector<8x1xf32>
    tpu.vector_store %arg9[%c0_15, %c0_16], %34 {strides = array<i32>} : memref<8x1xf32, #tpu.memory_space<vmem>>, vector<8x1xf32>,
    %c0_17 = arith.constant 0 : index
    %c0_18 = arith.constant 0 : index
    %36 = vector.load %arg8[%c0_17, %c0_18] : memref<8x1xf32, #tpu.memory_space<vmem>>, vector<8x1xf32>
    tpu.vector_store %arg8[%c0_17, %c0_18], %24 {strides = array<i32>} : memref<8x1xf32, #tpu.memory_space<vmem>>, vector<8x1xf32>,
    %c2_i32 = arith.constant 2 : i32
    %37 = arith.cmpi eq, %arg1, %c2_i32 : i32
    %38 = arith.extui %37 : i1 to i32
    %c0_i32_19 = arith.constant 0 : i32
    %39 = arith.cmpi ne, %38, %c0_i32_19 : i32
    scf.if %39 {
      %c0_20 = arith.constant 0 : index
      %c0_21 = arith.constant 0 : index
      %40 = vector.load %arg8[%c0_20, %c0_21] : memref<8x1xf32, #tpu.memory_space<vmem>>, vector<8x1xf32>
      %c0_22 = arith.constant 0 : index
      %c0_23 = arith.constant 0 : index
      %41 = vector.load %arg9[%c0_22, %c0_23] : memref<8x1xf32, #tpu.memory_space<vmem>>, vector<8x1xf32>
      %42 = math.log %41 : vector<8x1xf32>
      %43 = arith.addf %40, %42 : vector<8x1xf32>
      %c0_24 = arith.constant 0 : index
      %c0_25 = arith.constant 0 : index
      %44 = vector.load %arg7[%c0_24, %c0_25] : memref<8x1xf32, #tpu.memory_space<vmem>>, vector<8x1xf32>
      %45 = arith.subf %43, %44 : vector<8x1xf32>
      %46 = vector.shape_cast %45 : vector<8x1xf32> to vector<1x8x1xf32>
      %cst_26 = arith.constant dense<0.000000e+00> : vector<1xf32>
      %47 = vector.multi_reduction <add>, %46, %cst_26 [1, 2] : vector<1x8x1xf32> to vector<1xf32>
      %48 = vector.shape_cast %47 : vector<1xf32> to vector<1x1x1xf32>
      %49 = vector.extract %48[0, 0, 0] : f32 from vector<1x1x1xf32>
      %50 = vector.broadcast %49 : f32 to vector<1x8x128xf32>
      %c0_27 = arith.constant 0 : index
      %c0_28 = arith.constant 0 : index
      %c0_29 = arith.constant 0 : index
      %51 = vector.load %arg5[%c0_27, %c0_28, %c0_29] : memref<1x8x128xf32, #tpu.memory_space<vmem>>, vector<1x8x128xf32>
      tpu.vector_store %arg5[%c0_27, %c0_28, %c0_29], %50 {strides = array<i32>} : memref<1x8x128xf32, #tpu.memory_space<vmem>>, vector<1x8x128xf32>,
    } else {
    }
    return
  }
  func.func @transform_0(%arg0: i32, %arg1: i32) -> (i32, i32) {
    %c0_i32 = arith.constant 0 : i32
    %c0_i32_0 = arith.constant 0 : i32
    return %arg0, %c0_i32 : i32, i32
  }
  func.func @transform_1(%arg0: i32, %arg1: i32) -> (i32, i32) {
    %c0_i32 = arith.constant 0 : i32
    %c0_i32_0 = arith.constant 0 : i32
    %c0_i32_1 = arith.constant 0 : i32
    return %c0_i32, %c0_i32_0 : i32, i32
  }
  func.func @transform_2(%arg0: i32, %arg1: i32) -> (i32, i32) {
    %c0_i32 = arith.constant 0 : i32
    %c0_i32_0 = arith.constant 0 : i32
    return %arg1, %c0_i32 : i32, i32
  }
  func.func @transform_3(%arg0: i32, %arg1: i32) -> (i32, i32, i32) {
    %c0_i32 = arith.constant 0 : i32
    %c0_i32_0 = arith.constant 0 : i32
    %c0_i32_1 = arith.constant 0 : i32
    return %arg0, %c0_i32, %c0_i32_0 : i32, i32, i32
  }
}

</mosaic_0001>

<llo_original>
// kernel: tpu_custom_call.1
$region0: #{tpu_custom_call.1}
  #allocation0 [shape = 'u32[]', space=smem, size = 0x4, offset = 0x4, fixed_abs, tag = 'smem constant byte address 0x4 - core index']
  #allocation1 [shape = 'u32[144,128]{1,0:T(1,128)}', space=vmem, size = 0x12000, scoped, tag = 'internal scratch']
  #allocation2 [shape = 'f32[8,32]{1,0:T(8,128)}', space=vmem, size = 0x1000, scoped, tag = 'scratch operand']
  #allocation3 [shape = 'f32[8,1]{1,0:T(8,128)}', space=vmem, size = 0x1000, scoped, tag = 'scratch operand']
  #allocation4 [shape = 'f32[8,1]{1,0:T(8,128)}', space=vmem, size = 0x1000, scoped, tag = 'scratch operand']
  #allocation5 [shape = 'f32[8,1]{1,0:T(8,128)}', space=vmem, size = 0x1000, scoped, tag = 'scratch operand']
  %s0 = inlined_call_operand.hbm [shape: f32[8,32], index: 0, kind: input, shape index: {}]
  %s1 = inlined_call_operand.hbm [shape: f32[8,32], index: 1, kind: input, shape index: {}]
  %s2 = inlined_call_operand.hbm [shape: f32[20,32], index: 2, kind: input, shape index: {}]
  %s3 = inlined_call_operand.hbm [shape: f32[1,8,128], index: 3, kind: output, shape index: {}]
  %s4 = sld [smem:[#allocation0]]
  $region65: #{tpu_custom_call.1} parent=0
    _
  %s6 = ssub.s32 1, %s4
  %s7 = scalar_select 0, %s6, %s4
  $region1: #{tpu_custom_call.1} parent=0
    #allocation6 [shape = 'u8[4096]{0}', space=vmem, size = 0x1000, scoped, tag = 'input window, operand 0, single buffered']
    #allocation7 [shape = 's32[2]{0}', space=sflag, size = 0x8, scoped, tag = 'scoped memory for tpu_custom_call.1']
    #allocation8 [shape = 's32[2]{0}', space=sflag, size = 0x8, scoped, tag = 'scoped memory for tpu_custom_call.1']
    #allocation9 [shape = 'u8[4096]{0}', space=vmem, size = 0x1000, scoped, tag = 'input window, operand 1, single buffered']
    #allocation10 [shape = 's32[1]{0}', space=sflag, size = 0x4, scoped, tag = 'scoped memory for tpu_custom_call.1']
    #allocation11 [shape = 'u8[8192]{0}', space=vmem, size = 0x2000, scoped, tag = 'input window, operand 2']
    #allocation12 [shape = 'u8[4096]{0}', space=vmem, size = 0x1000, scoped, tag = 'output window, operand 0, single buffered']
    %8 = vsyncpa [#allocation7], 0
    %9 = vsyncpa [#allocation10], 0
    %10 = vsyncpa [#allocation8], 0
    loop: start=0, step=1, limit=5
    $region2: #{tpu_custom_call.1} parent=1 // loop_pre_header
      _
    $region3: #{tpu_custom_call.1} parent=1 // loop_header
      %s12 = sphi 0, %s16
      %p13 = scmp.ge.s32.totalorder %s12, 5
      %s19 = sphi 0, %s31
      %s20 = sphi 0, %s27
      %s21 = sphi 0, %s19
      %s22 = sphi 0, %s20
      %s23 = sphi 0, %s21
      %s24 = sphi 0, %s22
      %s34 = sphi 0, %s36
      %s37 = sphi 0, %s34
      %s38 = sphi 0, %s37
      %s54 = sphi 0, %s38
      %s58 = sphi 0, %s58
      %s60 = sphi 0, %s58
      %s61 = sphi 0, %s60
      %s75 = sphi 0, %s61
      %s81 = sphi 0, %s83
      %s84 = sphi 0, %s81
      %s85 = sphi 0, %s84
      %s101 = sphi 0, %s85
      %s107 = sphi 0, %s109
      %s110 = sphi 0, %s107
      %s111 = sphi 0, %s110
      %s127 = sphi 0, %s111
    $region4: #{tpu_custom_call.1} parent=1 // loop_header_branch
      %15 = sbr.rel (%p13) target = $region8
    $region5: #{tpu_custom_call.1} parent=1 // loop_body
      %s17 = ssub.s32 %s12, 1
      %s18 = ssub.s32 %s12, 2
      %s25 = sadd.s32 1, %s20
      %p26 = scmp.ge.s32.totalorder %s25, 3
      %s27 = scalar_select %p26, 0, %s25
      %s28 = sadd.s32 1, %s19
      %s29 = scalar_select %p26, %s28, %s19
      %p30 = scmp.ge.s32.totalorder %s29, 1
      %s31 = scalar_select %p30, 0, %s29
      %s32 = ssub.s32 %s19, %s31
      %p33 = scmp.eq.s32.totalorder %s32, 0
      %s35 = sadd.s32 %s34, 1
      %s36 = scalar_select %p33, %s34, %s35
      %p39 = pneg %p33
      %p40 = scmp.eq.s32.totalorder %s12, 2
      %p41 = por %p39, %p40
      %p42 = scmp.ne.s32.totalorder %s34, %s37
      %p43 = scmp.eq.s32.totalorder %s12, 0
      %p44 = por %p42, %p43
      %p45 = scmp.ne.s32.totalorder %s34, %s37
      %p46 = scmp.eq.s32.totalorder %s17, 2
      %p47 = por %p45, %p46
      %p48 = scmp.ne.s32.totalorder %s37, %s38
      %p49 = scmp.eq.s32.totalorder %s17, 0
      %p50 = por %p48, %p49
      %p51 = scmp.ne.s32.totalorder %s37, %s38
      %p52 = scmp.eq.s32.totalorder %s18, 2
      %p53 = por %p51, %p52
      %p55 = scmp.ne.s32.totalorder %s38, %s54
      %p56 = scmp.eq.s32.totalorder %s18, 0
      %p57 = por %p55, %p56
      %s59 = sadd.s32 %s58, 1
      %p62 = scmp.eq.s32.totalorder %s12, 2
      %p63 = scmp.ne.s32.totalorder %s58, %s60
      %p64 = scmp.eq.s32.totalorder %s12, 0
      %p65 = por %p63, %p64
      %p66 = scmp.ne.s32.totalorder %s58, %s60
      %p67 = scmp.eq.s32.totalorder %s17, 2
      %p68 = por %p66, %p67
      %p69 = scmp.ne.s32.totalorder %s60, %s61
      %p70 = scmp.eq.s32.totalorder %s17, 0
      %p71 = por %p69, %p70
      %p72 = scmp.ne.s32.totalorder %s60, %s61
      %p73 = scmp.eq.s32.totalorder %s18, 2
      %p74 = por %p72, %p73
      %p76 = scmp.ne.s32.totalorder %s61, %s75
      %p77 = scmp.eq.s32.totalorder %s18, 0
      %p78 = por %p76, %p77
      %s79 = ssub.s32 %s20, %s27
      %p80 = scmp.eq.s32.totalorder %s79, 0
      %s82 = sadd.s32 %s81, 1
      %s83 = scalar_select %p80, %s81, %s82
      %p86 = pneg %p80
      %p87 = scmp.eq.s32.totalorder %s12, 2
      %p88 = por %p86, %p87
      %p89 = scmp.ne.s32.totalorder %s81, %s84
      %p90 = scmp.eq.s32.totalorder %s12, 0
      %p91 = por %p89, %p90
      %p92 = scmp.ne.s32.totalorder %s81, %s84
      %p93 = scmp.eq.s32.totalorder %s17, 2
      %p94 = por %p92, %p93
      %p95 = scmp.ne.s32.totalorder %s84, %s85
      %p96 = scmp.eq.s32.totalorder %s17, 0
      %p97 = por %p95, %p96
      %p98 = scmp.ne.s32.totalorder %s84, %s85
      %p99 = scmp.eq.s32.totalorder %s18, 2
      %p100 = por %p98, %p99
      %p102 = scmp.ne.s32.totalorder %s85, %s101
      %p103 = scmp.eq.s32.totalorder %s18, 0
      %p104 = por %p102, %p103
      %s105 = ssub.s32 %s19, %s31
      %p106 = scmp.eq.s32.totalorder %s105, 0
      %s108 = sadd.s32 %s107, 1
      %s109 = scalar_select %p106, %s107, %s108
      %p112 = pneg %p106
      %p113 = scmp.eq.s32.totalorder %s12, 2
      %p114 = por %p112, %p113
      %p115 = scmp.ne.s32.totalorder %s107, %s110
      %p116 = scmp.eq.s32.totalorder %s12, 0
      %p117 = por %p115, %p116
      %p118 = scmp.ne.s32.totalorder %s107, %s110
      %p119 = scmp.eq.s32.totalorder %s17, 2
      %p120 = por %p118, %p119
      %p121 = scmp.ne.s32.totalorder %s110, %s111
      %p122 = scmp.eq.s32.totalorder %s17, 0
      %p123 = por %p121, %p122
      %p124 = scmp.ne.s32.totalorder %s110, %s111
      %p125 = scmp.eq.s32.totalorder %s18, 2
      %p126 = por %p124, %p125
      %p128 = scmp.ne.s32.totalorder %s111, %s127
      %p129 = scmp.eq.s32.totalorder %s18, 0
      %p130 = por %p128, %p129
      %p131 = scmp.le.s32.totalorder 1, %s12
      %p132 = scmp.lt.s32.totalorder %s12, 4
      %p133 = pnand %p131, %p132
      %p134 = pneg %p133
      // Predicated region
      $region9: #{tpu_custom_call.1} parent=5 // pred_check
        _
      $region10: #{tpu_custom_call.1} parent=5 // pred_check_branch
        %136 = sbr.rel (%p133) target = $region12
      $region11: #{tpu_custom_call.1} parent=5 // pred_region
        %s137 = ssub.s32 %s12, 1
        // Predicated region
        $region13: #{tpu_custom_call.1} parent=11 // pred_check
          %p138 = pneg %p50
        $region14: #{tpu_custom_call.1} parent=11 // pred_check_branch
          %140 = sbr.rel (%p138) target = $region16
        $region15: #{tpu_custom_call.1} parent=11 // pred_region
          %s142 = ssub.s32 128, 128
          %143 = vsyncadd [#allocation7], %s142
          %s144 = smul.addr %s21, 128
          %s145 = scalar_lea.hbm %s0, %s144
          %s147 = sshll.u32 [#allocation6], 4
          %s148 = int_to_ptr.vmem [resolvable:$true] %s147
          %150 = dma.hbm_to_vmem [thread:$0]  %s145, 128, %s148, [#allocation7]
        $region16: #{tpu_custom_call.1} parent=11 // pred_fallthru
          _
        // Predicated region
        $region17: #{tpu_custom_call.1} parent=11 // pred_check
          %p151 = pneg %p71
        $region18: #{tpu_custom_call.1} parent=11 // pred_check_branch
          %153 = sbr.rel (%p151) target = $region20
        $region19: #{tpu_custom_call.1} parent=11 // pred_region
          %s155 = ssub.s32 128, 128
          %156 = vsyncadd [#allocation10], %s155
          %s158 = sshll.u32 [#allocation9], 4
          %s159 = int_to_ptr.vmem [resolvable:$true] %s158
          %161 = dma.hbm_to_vmem [thread:$0]  %s1, 128, %s159, [#allocation10]
        $region20: #{tpu_custom_call.1} parent=11 // pred_fallthru
          _
      $region12: #{tpu_custom_call.1} parent=5 // pred_fallthru
        _
      %p162 = scmp.lt.s32.totalorder %s12, 3
      // Predicated region
      $region21: #{tpu_custom_call.1} parent=5 // pred_check
        %p163 = pneg %p162
      $region22: #{tpu_custom_call.1} parent=5 // pred_check_branch
        %165 = sbr.rel (%p163) target = $region24
      $region23: #{tpu_custom_call.1} parent=5 // pred_region
        // Predicated region
        $region25: #{tpu_custom_call.1} parent=23 // pred_check
          %p166 = pneg %p91
        $region26: #{tpu_custom_call.1} parent=23 // pred_check_branch
          %168 = sbr.rel (%p166) target = $region28
        $region27: #{tpu_custom_call.1} parent=23 // pred_region
          %s169 = sand.u32 %s12, 1
          %s170 = scalar_lea.sflag [#allocation7], %s169
          %s171 = sand.u32 %s81, 1
          %s172 = smul.addr %s171, 8
          %s173 = scalar_lea.vmem [#allocation11], %s172
          %s175 = ssub.s32 128, 128
          %176 = vsyncadd %s170, %s175
          %s177 = smul.addr %s20, 128
          %s178 = scalar_lea.hbm %s2, %s177
          %s180 = sshll.u32 %s173, 4
          %s181 = int_to_ptr.vmem [resolvable:$true] %s180
          %183 = dma.hbm_to_vmem [thread:$0]  %s178, 128, %s181, %s170
        $region28: #{tpu_custom_call.1} parent=23 // pred_fallthru
          _
      $region24: #{tpu_custom_call.1} parent=5 // pred_fallthru
        _
      %p184 = scmp.le.s32.totalorder 1, %s12
      %p185 = scmp.lt.s32.totalorder %s12, 4
      %p186 = pnand %p184, %p185
      %p187 = pneg %p186
      // Predicated region
      $region29: #{tpu_custom_call.1} parent=5 // pred_check
        _
      $region30: #{tpu_custom_call.1} parent=5 // pred_check_branch
        %189 = sbr.rel (%p186) target = $region32
      $region31: #{tpu_custom_call.1} parent=5 // pred_region
        %s190 = ssub.s32 %s12, 1
        // Predicated region
        $region33: #{tpu_custom_call.1} parent=31 // pred_check
          %p191 = pneg %p50
        $region34: #{tpu_custom_call.1} parent=31 // pred_check_branch
          %193 = sbr.rel (%p191) target = $region36
        $region35: #{tpu_custom_call.1} parent=31 // pred_region
          %194 = dma.done [#allocation7], 128
        $region36: #{tpu_custom_call.1} parent=31 // pred_fallthru
          _
        // Predicated region
        $region37: #{tpu_custom_call.1} parent=31 // pred_check
          %p195 = pneg %p71
        $region38: #{tpu_custom_call.1} parent=31 // pred_check_branch
          %197 = sbr.rel (%p195) target = $region40
        $region39: #{tpu_custom_call.1} parent=31 // pred_region
          %198 = dma.done [#allocation10], 128
        $region40: #{tpu_custom_call.1} parent=31 // pred_fallthru
          _
        %s199 = sand.u32 %s17, 1
        %s200 = scalar_lea.sflag [#allocation7], %s199
        %s201 = sand.u32 %s84, 1
        %s202 = smul.addr %s201, 8
        %s203 = scalar_lea.vmem [#allocation11], %s202
        // Predicated region
        $region41: #{tpu_custom_call.1} parent=31 // pred_check
          %p204 = pneg %p97
        $region42: #{tpu_custom_call.1} parent=31 // pred_check_branch
          %206 = sbr.rel (%p204) target = $region44
        $region43: #{tpu_custom_call.1} parent=31 // pred_region
          %207 = dma.done %s200, 128
        $region44: #{tpu_custom_call.1} parent=31 // pred_fallthru
          _
        %p208 = pneg %p50
        %p209 = pneg %p47
        %p210 = pneg %p71
        %p211 = pneg %p68
        %s212 = sand.u32 %s17, 1
        %s213 = scalar_lea.sflag [#allocation7], %s212
        %s214 = sand.u32 %s84, 1
        %s215 = smul.addr %s214, 8
        %s216 = scalar_lea.vmem [#allocation11], %s215
        %p217 = pneg %p97
        %p218 = pneg %p94
        %p219 = pneg %p123
        %p220 = pneg %p120
        %p221 = scmp.eq.s32.totalorder %s22, 0
        // Predicated region
        $region45: #{tpu_custom_call.1} parent=31 // pred_check
          %p222 = pneg %p221
        $region46: #{tpu_custom_call.1} parent=31 // pred_check_branch
          %224 = sbr.rel (%p222) target = $region48
        $region47: #{tpu_custom_call.1} parent=31 // pred_region
          %v225 = vld [vmem:[#allocation6] sm:$0xff]
          %v226 = vld [vmem:[#allocation9] sm:$0xff]
          %v227 = vmul.f32 %v225, %v225
          %vm228 = vcmask 261120
          %v229 = vsel %vm228, %v227, 0.0
          %230 = vadd.xlane.f32.xlu0 %v229
          %v231 = vpop.xlane.xlu0 %230
          %v232 = vmax.f32 %v231, 1e-08
          %v233 = vrsqrt.pop %v232
          %v234 = vmul.f32 %v226, %v226
          %v235 = vsel %vm228, %v234, 0.0
          %236 = vadd.xlane.f32.xlu0 %v235
          %v237 = vpop.xlane.xlu0 %236
          %v238 = vmax.f32 %v237, 1e-08
          %v239 = vrsqrt.pop %v238
          %v240 = vmul.f32 %v233, 20.0
          %v241 = vmul.f32 %v225, %v240
          %v242 = vmul.f32 %v226, %v239
          %243 = vst.msk [vmem:[#allocation2] sm:$0xff] %vm228, %v241
          %s244 = smul.u32 %s21, 8
          %s245 = scalar_lea.vmem [#allocation9], %s244
          %v246 = vld [vmem:[%s245] sm:$0xff]
          %v247 = vmul.f32 %v246, %v246
          %v248 = vsel %vm228, %v247, 0.0
          %249 = vadd.xlane.f32.xlu0 %v248
          %v250 = vpop.xlane.xlu0 %249
          %v251 = vmax.f32 %v250, 1e-08
          %v252 = vrsqrt.pop %v251
          %v253 = vmul.f32 %v246, %v252
          %v254 = vmul.f32 %v241, %v253
          %v255 = vsel %vm228, %v254, 0.0
          %256 = vadd.xlane.f32.xlu0 %v255
          %v257 = vpop.xlane.xlu0 %256
          %vm258 = vcmask 7168
          %259 = vst.msk [vmem:[#allocation3] sm:$0xff] %vm258, %v257
          %v261 = vsel %vm228, %v241, 0
          %v264 = vsel %vm228, %v242, 0
          %266 = vmatprep.subr.mxu0 0.0
          %267 = vmatpush1.xpose.msra.mxu0 0.0
          %268 = vmatprep.subr.mxu0 0.0
          %269 = vmatpush1.xpose.msra.mxu0 0.0
          %270 = vmatprep.subr.mxu0 0.0
          %271 = vmatpush1.xpose.msra.mxu0 0.0
          %272 = vmatprep.subr.mxu0 0.0
          %273 = vmatpush1.xpose.msra.mxu0 0.0
          %274 = vmatprep.subr.mxu0 0.0
          %275 = vmatpush1.xpose.msra.mxu0 0.0
          %276 = vmatprep.subr.mxu0 0.0
          %277 = vmatpush1.xpose.msra.mxu0 0.0
          %278 = vmatprep.subr.mxu0 0.0
          %279 = vmatpush1.xpose.msra.mxu0 0.0
          %280 = vmatprep.subr.mxu0 0.0
          %281 = vmatpush1.xpose.msra.mxu0 0.0
          %282 = vmatprep.subr.mxu0 0.0
          %283 = vmatpush1.xpose.msra.mxu0 0.0
          %284 = vmatprep.subr.mxu0 0.0
          %285 = vmatpush1.xpose.msra.mxu0 0.0
          %286 = vmatprep.subr.mxu0 0.0
          %287 = vmatpush1.xpose.msra.mxu0 0.0
          %288 = vmatprep.subr.mxu0 0.0
          %289 = vmatpush1.xpose.msra.mxu0 0.0
          %290 = vmatprep.subr.mxu0 0.0
          %291 = vmatpush1.xpose.msra.mxu0 0.0
          %292 = vmatprep.subr.mxu0 0.0
          %293 = vmatpush1.xpose.msra.mxu0 0.0
          %294 = vmatprep.subr.mxu0 0.0
          %295 = vmatpush1.xpose.msra.mxu0 0.0
          %296 = vmatprep.subr.mxu0 0.0
          %297 = vmatpush1.xpose.msra.mxu0 %v264
          %298 = vmatprep.subr.mxu0 0.0
          %299 = vmatpush2.xpose.msra.mxu0 0.0
          %300 = vmatprep.subr.mxu0 0.0
          %301 = vmatpush2.xpose.msra.mxu0 0.0
          %302 = vmatprep.subr.mxu0 0.0
          %303 = vmatpush2.xpose.msra.mxu0 0.0
          %304 = vmatprep.subr.mxu0 0.0
          %305 = vmatpush2.xpose.msra.mxu0 0.0
          %306 = vmatprep.subr.mxu0 0.0
          %307 = vmatpush2.xpose.msra.mxu0 0.0
          %308 = vmatprep.subr.mxu0 0.0
          %309 = vmatpush2.xpose.msra.mxu0 0.0
          %310 = vmatprep.subr.mxu0 0.0
          %311 = vmatpush2.xpose.msra.mxu0 0.0
          %312 = vmatprep.subr.mxu0 0.0
          %313 = vmatpush2.xpose.msra.mxu0 0.0
          %314 = vmatprep.subr.mxu0 0.0
          %315 = vmatpush2.xpose.msra.mxu0 0.0
          %316 = vmatprep.subr.mxu0 0.0
          %317 = vmatpush2.xpose.msra.mxu0 0.0
          %318 = vmatprep.subr.mxu0 0.0
          %319 = vmatpush2.xpose.msra.mxu0 0.0
          %320 = vmatprep.subr.mxu0 0.0
          %321 = vmatpush2.xpose.msra.mxu0 0.0
          %322 = vmatprep.subr.mxu0 0.0
          %323 = vmatpush2.xpose.msra.mxu0 0.0
          %324 = vmatprep.subr.mxu0 0.0
          %325 = vmatpush2.xpose.msra.mxu0 0.0
          %326 = vmatprep.subr.mxu0 0.0
          %327 = vmatpush2.xpose.msra.mxu0 0.0
          %328 = vmatprep.subr.mxu0 0.0
          %329 = vmatpush2.xpose.msra.mxu0 0.0
          %330 = vmatprep.mubr.f32.mxu0 0.0
          %331 = vmatmul.mubr.f32.gmra.mxu0 %v261
          %v332 = vpop.f32.mrf.mxu0
          %v333 = vadd.f32 0.0, %v332
          %v334 = vpop.f32.mrf.mxu0
          %335 = vdwg.mxu0
          %vm336 = vcmask 64512
          %v337 = vsel %vm336, %v333, -inf
          %338 = vmax.xlane.f32.xlu0 %v337
          %v339 = vpop.xlane.xlu0 %338
          %340 = vst.msk [vmem:[#allocation4] sm:$0xff] %vm258, %v339
          %v341 = vsub.f32 %v333, %v339
          %v342 = vmul.f32 %v341, 1.442695
          %v343 = vpow.pop %v342
          %v344 = vsel %vm336, %v343, 0.0
          %345 = vadd.xlane.f32.xlu0 %v344
          %v346 = vpop.xlane.xlu0 %345
          %347 = vst.msk [vmem:[#allocation5] sm:$0xff] %vm258, %v346
        $region48: #{tpu_custom_call.1} parent=31 // pred_fallthru
          _
        %v348 = vld [vmem:[%s203] sm:$0xff]
        %v349 = vmul.f32 %v348, %v348
        %vm350 = vcmask 261120
        %v352 = vsel %vm350, 1.0, 0
        %v355 = vsel %vm350, %v349, 0
        %357 = vmatprep.subr.mxu0 0.0
        %358 = vmatpush1.xpose.msra.mxu0 0.0
        %359 = vmatprep.subr.mxu0 0.0
        %360 = vmatpush1.xpose.msra.mxu0 0.0
        %361 = vmatprep.subr.mxu0 0.0
        %362 = vmatpush1.xpose.msra.mxu0 0.0
        %363 = vmatprep.subr.mxu0 0.0
        %364 = vmatpush1.xpose.msra.mxu0 0.0
        %365 = vmatprep.subr.mxu0 0.0
        %366 = vmatpush1.xpose.msra.mxu0 0.0
        %367 = vmatprep.subr.mxu0 0.0
        %368 = vmatpush1.xpose.msra.mxu0 0.0
        %369 = vmatprep.subr.mxu0 0.0
        %370 = vmatpush1.xpose.msra.mxu0 0.0
        %371 = vmatprep.subr.mxu0 0.0
        %372 = vmatpush1.xpose.msra.mxu0 0.0
        %373 = vmatprep.subr.mxu0 0.0
        %374 = vmatpush1.xpose.msra.mxu0 0.0
        %375 = vmatprep.subr.mxu0 0.0
        %376 = vmatpush1.xpose.msra.mxu0 0.0
        %377 = vmatprep.subr.mxu0 0.0
        %378 = vmatpush1.xpose.msra.mxu0 0.0
        %379 = vmatprep.subr.mxu0 0.0
        %380 = vmatpush1.xpose.msra.mxu0 0.0
        %381 = vmatprep.subr.mxu0 0.0
        %382 = vmatpush1.xpose.msra.mxu0 0.0
        %383 = vmatprep.subr.mxu0 0.0
        %384 = vmatpush1.xpose.msra.mxu0 0.0
        %385 = vmatprep.subr.mxu0 0.0
        %386 = vmatpush1.xpose.msra.mxu0 0.0
        %387 = vmatprep.subr.mxu0 0.0
        %388 = vmatpush1.xpose.msra.mxu0 %v355
        %389 = vmatprep.subr.mxu0 0.0
        %390 = vmatpush2.xpose.msra.mxu0 0.0
        %391 = vmatprep.subr.mxu0 0.0
        %392 = vmatpush2.xpose.msra.mxu0 0.0
        %393 = vmatprep.subr.mxu0 0.0
        %394 = vmatpush2.xpose.msra.mxu0 0.0
        %395 = vmatprep.subr.mxu0 0.0
        %396 = vmatpush2.xpose.msra.mxu0 0.0
        %397 = vmatprep.subr.mxu0 0.0
        %398 = vmatpush2.xpose.msra.mxu0 0.0
        %399 = vmatprep.subr.mxu0 0.0
        %400 = vmatpush2.xpose.msra.mxu0 0.0
        %401 = vmatprep.subr.mxu0 0.0
        %402 = vmatpush2.xpose.msra.mxu0 0.0
        %403 = vmatprep.subr.mxu0 0.0
        %404 = vmatpush2.xpose.msra.mxu0 0.0
        %405 = vmatprep.subr.mxu0 0.0
        %406 = vmatpush2.xpose.msra.mxu0 0.0
        %407 = vmatprep.subr.mxu0 0.0
        %408 = vmatpush2.xpose.msra.mxu0 0.0
        %409 = vmatprep.subr.mxu0 0.0
        %410 = vmatpush2.xpose.msra.mxu0 0.0
        %411 = vmatprep.subr.mxu0 0.0
        %412 = vmatpush2.xpose.msra.mxu0 0.0
        %413 = vmatprep.subr.mxu0 0.0
        %414 = vmatpush2.xpose.msra.mxu0 0.0
        %415 = vmatprep.subr.mxu0 0.0
        %416 = vmatpush2.xpose.msra.mxu0 0.0
        %417 = vmatprep.subr.mxu0 0.0
        %418 = vmatpush2.xpose.msra.mxu0 0.0
        %419 = vmatprep.subr.mxu0 0.0
        %420 = vmatpush2.xpose.msra.mxu0 0.0
        %421 = vmatprep.mubr.f32.mxu0 0.0
        %422 = vmatmul.mubr.f32.gmra.mxu0 %v352
        %v423 = vpop.f32.mrf.mxu0
        %v424 = vadd.f32 0.0, %v423
        %v425 = vpop.f32.mrf.mxu0
        %426 = vdwg.mxu0
        %v427 = vmax.f32 %v424, 1e-08
        %v428 = vrsqrt.pop %v427
        %v429 = vld [vmem:[#allocation2] sm:$0xff]
        %v431 = vsel %vm350, %v429, 0
        %v434 = vsel %vm350, %v348, 0
        %436 = vmatprep.subr.mxu0 0.0
        %437 = vmatpush1.xpose.msra.mxu0 0.0
        %438 = vmatprep.subr.mxu0 0.0
        %439 = vmatpush1.xpose.msra.mxu0 0.0
        %440 = vmatprep.subr.mxu0 0.0
        %441 = vmatpush1.xpose.msra.mxu0 0.0
        %442 = vmatprep.subr.mxu0 0.0
        %443 = vmatpush1.xpose.msra.mxu0 0.0
        %444 = vmatprep.subr.mxu0 0.0
        %445 = vmatpush1.xpose.msra.mxu0 0.0
        %446 = vmatprep.subr.mxu0 0.0
        %447 = vmatpush1.xpose.msra.mxu0 0.0
        %448 = vmatprep.subr.mxu0 0.0
        %449 = vmatpush1.xpose.msra.mxu0 0.0
        %450 = vmatprep.subr.mxu0 0.0
        %451 = vmatpush1.xpose.msra.mxu0 0.0
        %452 = vmatprep.subr.mxu0 0.0
        %453 = vmatpush1.xpose.msra.mxu0 0.0
        %454 = vmatprep.subr.mxu0 0.0
        %455 = vmatpush1.xpose.msra.mxu0 0.0
        %456 = vmatprep.subr.mxu0 0.0
        %457 = vmatpush1.xpose.msra.mxu0 0.0
        %458 = vmatprep.subr.mxu0 0.0
        %459 = vmatpush1.xpose.msra.mxu0 0.0
        %460 = vmatprep.subr.mxu0 0.0
        %461 = vmatpush1.xpose.msra.mxu0 0.0
        %462 = vmatprep.subr.mxu0 0.0
        %463 = vmatpush1.xpose.msra.mxu0 0.0
        %464 = vmatprep.subr.mxu0 0.0
        %465 = vmatpush1.xpose.msra.mxu0 0.0
        %466 = vmatprep.subr.mxu0 0.0
        %467 = vmatpush1.xpose.msra.mxu0 %v434
        %468 = vmatprep.subr.mxu0 0.0
        %469 = vmatpush2.xpose.msra.mxu0 0.0
        %470 = vmatprep.subr.mxu0 0.0
        %471 = vmatpush2.xpose.msra.mxu0 0.0
        %472 = vmatprep.subr.mxu0 0.0
        %473 = vmatpush2.xpose.msra.mxu0 0.0
        %474 = vmatprep.subr.mxu0 0.0
        %475 = vmatpush2.xpose.msra.mxu0 0.0
        %476 = vmatprep.subr.mxu0 0.0
        %477 = vmatpush2.xpose.msra.mxu0 0.0
        %478 = vmatprep.subr.mxu0 0.0
        %479 = vmatpush2.xpose.msra.mxu0 0.0
        %480 = vmatprep.subr.mxu0 0.0
        %481 = vmatpush2.xpose.msra.mxu0 0.0
        %482 = vmatprep.subr.mxu0 0.0
        %483 = vmatpush2.xpose.msra.mxu0 0.0
        %484 = vmatprep.subr.mxu0 0.0
        %485 = vmatpush2.xpose.msra.mxu0 0.0
        %486 = vmatprep.subr.mxu0 0.0
        %487 = vmatpush2.xpose.msra.mxu0 0.0
        %488 = vmatprep.subr.mxu0 0.0
        %489 = vmatpush2.xpose.msra.mxu0 0.0
        %490 = vmatprep.subr.mxu0 0.0
        %491 = vmatpush2.xpose.msra.mxu0 0.0
        %492 = vmatprep.subr.mxu0 0.0
        %493 = vmatpush2.xpose.msra.mxu0 0.0
        %494 = vmatprep.subr.mxu0 0.0
        %495 = vmatpush2.xpose.msra.mxu0 0.0
        %496 = vmatprep.subr.mxu0 0.0
        %497 = vmatpush2.xpose.msra.mxu0 0.0
        %498 = vmatprep.subr.mxu0 0.0
        %499 = vmatpush2.xpose.msra.mxu0 0.0
        %500 = vmatprep.mubr.f32.mxu0 0.0
        %501 = vmatmul.mubr.f32.gmra.mxu0 %v431
        %v502 = vpop.f32.mrf.mxu0
        %v503 = vadd.f32 0.0, %v502
        %v504 = vpop.f32.mrf.mxu0
        %505 = vdwg.mxu0
        %v506 = vlaneseq
        %v507 = vshrl.u32 %v506, 7
        %v508 = vsub.s32 0, %v507
        %v509 = vrot.slane %v428, %v508
        %v510 = vmul.f32 %v503, %v509
        %v511 = vlaneseq
        %v512 = vand.u32 %v511, 127
        %s513 = smul.u32 %s22, 8
        %s514 = ssub.s32 20, %s513
        %v515 = vstv %s514
        %vm516 = vcmp.lt.s32.totalorder %v512, %v515
        %v517 = vsel %vm516, %v510, -1e+30
        %v518 = vld [vmem:[#allocation4] sm:$0xff]
        %vm519 = vcmask 64512
        %v520 = vsel %vm519, %v517, -inf
        %521 = vmax.xlane.f32.xlu0 %v520
        %v522 = vpop.xlane.xlu0 %521
        %v523 = vmax.f32 %v518, %v522
        %v524 = vsub.f32 %v518, %v523
        %v525 = vmul.f32 %v524, 1.442695
        %v526 = vpow.pop %v525
        %v527 = vld [vmem:[#allocation5] sm:$0xff]
        %v528 = vmul.f32 %v527, %v526
        %530 = vset.pattern.permute.xlu0 0
        %531 = vperm.xlu0 %530, %v523
        %v532 = vpop.permute.xlu0 %531
        %v534 = vsub.f32 %v517, %v532
        %v535 = vmul.f32 %v534, 1.442695
        %v536 = vpow.pop %v535
        %v537 = vsel %vm519, %v536, 0.0
        %538 = vadd.xlane.f32.xlu0 %v537
        %v539 = vpop.xlane.xlu0 %538
        %v540 = vadd.f32 %v528, %v539
        %vm541 = vcmask 7168
        %542 = vst.msk [vmem:[#allocation5] sm:$0xff] %vm541, %v540
        %543 = vst.msk [vmem:[#allocation4] sm:$0xff] %vm541, %v523
        %p544 = scmp.eq.s32.totalorder %s22, 2
        // Predicated region
        $region49: #{tpu_custom_call.1} parent=31 // pred_check
          %p545 = pneg %p544
        $region50: #{tpu_custom_call.1} parent=31 // pred_check_branch
          %547 = sbr.rel (%p545) target = $region52
        $region51: #{tpu_custom_call.1} parent=31 // pred_region
          %v548 = vld [vmem:[#allocation4] sm:$0xff]
          %v549 = vld [vmem:[#allocation5] sm:$0xff]
          %v550 = vlog2.pop %v549
          %v551 = vmul.f32 %v550, 0.6931472
          %v552 = vadd.f32 %v548, %v551
          %v553 = vld [vmem:[#allocation3] sm:$0xff]
          %v554 = vsub.f32 %v552, %v553
          %v555 = vsel %vm541, %v554, 0.0
          %556 = vadd.xlane.f32.xlu0 %v555
          %v557 = vpop.xlane.xlu0 %556
          %v558 = vrot.slane %v557, 4
          %v559 = vadd.f32 %v557, %v558
          %v560 = vrot.slane %v559, 2
          %v561 = vadd.f32 %v559, %v560
          %v562 = vrot.slane %v561, 1
          %v563 = vadd.f32 %v561, %v562
          %s564 = vtos %v563
          %v565 = vstv %s564
          %566 = vst [vmem:[#allocation12] sm:$0xff] %v565
        $region52: #{tpu_custom_call.1} parent=31 // pred_fallthru
          _
        // Predicated region
        $region53: #{tpu_custom_call.1} parent=31 // pred_check
          %p567 = pneg %p120
        $region54: #{tpu_custom_call.1} parent=31 // pred_check_branch
          %569 = sbr.rel (%p567) target = $region56
        $region55: #{tpu_custom_call.1} parent=31 // pred_region
          %s571 = ssub.s32 128, 128
          %572 = vsyncadd [#allocation8], %s571
          %s573 = smul.addr %s21, 128
          %s574 = scalar_lea.hbm %s3, %s573
          %s576 = sshll.u32 [#allocation12], 4
          %s577 = int_to_ptr.vmem [resolvable:$true] %s576
          %579 = dma.vmem_to_hbm [thread:$0]  %s577, 128, %s574, [#allocation8]
        $region56: #{tpu_custom_call.1} parent=31 // pred_fallthru
          _
        // Predicated region
        $region57: #{tpu_custom_call.1} parent=31 // pred_check
          %p580 = pneg %p120
        $region58: #{tpu_custom_call.1} parent=31 // pred_check_branch
          %582 = sbr.rel (%p580) target = $region60
        $region59: #{tpu_custom_call.1} parent=31 // pred_region
          %583 = dma.done [#allocation8], 128
        $region60: #{tpu_custom_call.1} parent=31 // pred_fallthru
          _
      $region32: #{tpu_custom_call.1} parent=5 // pred_fallthru
        _
      %p584 = scmp.le.s32.totalorder 2, %s12
      // Predicated region
      $region61: #{tpu_custom_call.1} parent=5 // pred_check
        %p585 = pneg %p584
      $region62: #{tpu_custom_call.1} parent=5 // pred_check_branch
        %587 = sbr.rel (%p585) target = $region64
      $region63: #{tpu_custom_call.1} parent=5 // pred_region
        %s588 = ssub.s32 %s12, 2
      $region64: #{tpu_custom_call.1} parent=5 // pred_fallthru
        _
    $region6: #{tpu_custom_call.1} parent=1 // loop_footer
      %s16 = sadd.s32 1, %s12
    $region7: #{tpu_custom_call.1} parent=1 // loop_footer_branch
      %11 = sbr.rel target = $region3
    $region8: #{tpu_custom_call.1} parent=1 // loop_exit
      _
    %589 = vsyncpa [#allocation7], 1
    %s590 = scalar_lea.sflag [#allocation7], 1
    %591 = vsyncpa %s590, 1
    %592 = vsyncpa [#allocation10], 1
    %593 = vsyncpa [#allocation8], 1
    %s594 = scalar_lea.sflag [#allocation8], 1
    %595 = vsyncpa %s594, 1

</llo_original>
